<compile_context>
chip_gen: v7x
topology: tpu7x:2x2x1
jax: 0.10.0
libtpu: 0.0.40
codegen_flags: <defaults>
</compile_context>

<pallas_src>
import math

import jax
import jax.numpy as jnp
from jax import lax
from jax.experimental import pallas as pl
from jax.experimental.pallas import tpu as pltpu


def _round_up(x, m):
    return ((x + m - 1) // m) * m


def _vmem_capacity_bytes():
    try:
        info = pltpu.get_tpu_info()
        cap = getattr(info, "vmem_capacity_bytes", None)
        if cap:
            return int(cap)
    except Exception:
        pass
    return 64 * 2 ** 20          # conservative fallback (v7x per-core VMEM)


def _make_kernel(n_rows, tile_rows, tiles_per_split, cp, may_be_partial):
    """Reduction body; every shape constant is a static Python int."""

    def plain_update(x_ref, max_sc, sum_sc):
        x = x_ref[0]                                     # [tile_rows, CP], native dtype
        max_sc[...] = jnp.maximum(max_sc[...],
                                  jnp.max(x, axis=0, keepdims=True))
        sum_sc[...] = sum_sc[...] + jnp.sum(x.astype(jnp.float32),
                                            axis=0, keepdims=True)

    def kernel(x_ref, o_ref, max_sc, sum_sc):
        # grid = (B, n_split, tiles_per_split): axes 0/1 are parallel (batches,
        # core split), axis 2 is the sequential reduction over packed row tiles.
        s = pl.program_id(1)
        n = pl.program_id(2)

        @pl.when(n == 0)
        def _init():
            max_sc[...] = jnp.full(max_sc.shape, -jnp.inf, dtype=max_sc.dtype)
            sum_sc[...] = jnp.zeros(sum_sc.shape, dtype=sum_sc.dtype)

        if may_be_partial:
            # Rows of real data remaining for this tile (can exceed tile_rows,
            # or be <= 0 for phantom tiles of the last core split).
            valid = n_rows - (s * tiles_per_split + n) * tile_rows

            @pl.when(valid >= tile_rows)
            def _full():
                plain_update(x_ref, max_sc, sum_sc)

            @pl.when(valid < tile_rows)
            def _partial():
                # Row-granular mask (no per-lane arithmetic).  Rows >= `valid`
                # hold garbage (partial Pallas block / re-read phantom block);
                # they contribute -inf to the max and 0 to the sum.
                x = x_ref[0]
                row = lax.broadcasted_iota(jnp.int32, (tile_rows, cp), 0)
                ok = row < valid
                xm = jnp.where(ok, x, jnp.asarray(-jnp.inf, dtype=x.dtype))
                xs = jnp.where(ok, x.astype(jnp.float32), 0.0)
                max_sc[...] = jnp.maximum(max_sc[...],
                                          jnp.max(xm, axis=0, keepdims=True))
                sum_sc[...] = sum_sc[...] + jnp.sum(xs, axis=0, keepdims=True)
        else:
            plain_update(x_ref, max_sc, sum_sc)

        @pl.when(n == pl.num_programs(2) - 1)
        def _finalize():
            # Two direct, full-lane (CP % 128 == 0) stores; no concatenate.
            o_ref[0, 0, 0:1, :] = max_sc[...].astype(jnp.float32)
            o_ref[0, 0, 1:2, :] = sum_sc[...]

    return kernel


def global_max_avg_pool(x, *, block_bytes=None, core_split=None):
    """x: [B, N, C] -> [B, 2*C] = concat(max over N, mean over N)."""
    B, N, C = x.shape
    assert N >= 1
    assert N < 2 ** 31          # row-index arithmetic stays in int32
    in_dtype = x.dtype

    # ---- lane-dense packing: fold g consecutive points into the lane axis so
    # the packed width CP = g*C is a multiple of 128 (g == 1 if C already is).
    g = 128 // math.gcd(C, 128)
    CP = g * C
    n_full = N // g                         # packed rows of g full points each
    rem = N - n_full * g                    # leftover points (< g) -> epilogue

    if n_full == 0:
        # Fewer than g points total: a kernel launch is not worth it.
        xf = x.astype(jnp.float32)
        out = jnp.concatenate([jnp.max(xf, axis=1), jnp.mean(xf, axis=1)], -1)
        return out.astype(in_dtype)

    # Main-body view [B, n_full, CP].  Free bitcast reshape when g | N; when
    # g does not divide N only the prefix is packed (the tiny tail is folded in
    # the JAX epilogue below).
    if rem == 0:
        xp = x.reshape(B, n_full, CP)
    else:
        xp = x[:, : n_full * g, :].reshape(B, n_full, CP)

    itemsize = jnp.dtype(in_dtype).itemsize

    # ---- generation-aware tile sizing: ~75% of physical VMEM usable, input
    # tile is double-buffered (2x), small headroom for output/scratch. --------
    vmem_cap = _vmem_capacity_bytes()
    usable = int(vmem_cap * 0.75)
    max_block = max(8 * CP * itemsize, (usable - 4 * 2 ** 20) // 2)
    if block_bytes is None:
        block_bytes = min(32 * 2 ** 20, max_block)
    block_bytes = min(block_bytes, max_block)
    rows_budget = max(8, (block_bytes // (CP * itemsize)) // 8 * 8)

    if core_split is None:
        core_split = 2 if B == 1 else 1     # keep both v7x TensorCores busy
    core_split = max(1, core_split)

    if n_full < 8:
        tile_rows = n_full                  # single full-dim tile (legal block)
    else:
        per_split = pl.cdiv(n_full, core_split)
        tile_rows = min(rows_budget, _round_up(per_split, 8), (n_full // 8) * 8)
        tile_rows = max(8, tile_rows)
    num_tiles = pl.cdiv(n_full, tile_rows)

    n_split = max(1, min(core_split, num_tiles))
    tps = pl.cdiv(num_tiles, n_split)

    may_be_partial = (n_full % tile_rows != 0) or (n_split * tps != num_tiles)

    if n_split * tps == num_tiles:
        in_map = lambda b, s, n: (b, s * tps + n, 0)
    else:  # clamp phantom tiles of the last split onto a real (already-read) block
        in_map = lambda b, s, n: (b, jnp.minimum(s * tps + n, num_tiles - 1), 0)

    tile_bytes = tile_rows * CP * itemsize
    vmem_limit = int(min(usable, 2 * tile_bytes + 4 * 2 ** 20))
    vmem_limit = max(vmem_limit, 16 * 2 ** 20)

    kernel = _make_kernel(n_full, tile_rows, tps, CP, may_be_partial)

    packed = pl.pallas_call(
        kernel,
        out_shape=jax.ShapeDtypeStruct((B, n_split, 2, CP), jnp.float32),
        grid_spec=pltpu.PrefetchScalarGridSpec(
            num_scalar_prefetch=0,
            grid=(B, n_split, tps),
            in_specs=[pl.BlockSpec((1, tile_rows, CP), in_map)],
            out_specs=pl.BlockSpec((1, 1, 2, CP), lambda b, s, n: (b, s, 0, 0)),
            scratch_shapes=[
                pltpu.VMEM((1, CP), in_dtype),      # running max (exact in any dtype)
                pltpu.VMEM((1, CP), jnp.float32),   # running sum (f32 accumulation)
            ],
        ),
        compiler_params=pltpu.CompilerParams(
            dimension_semantics=("parallel", "parallel", "arbitrary"),
            vmem_limit_bytes=vmem_limit,
        ),
    )(xp)

    # Tiny epilogue: reduce over core splits, fold the g lane groups back to C
    # channels, add the <g leftover points, finish the mean, concat (max||avg).
    pmax = packed[:, :, 0, :].reshape(B, n_split * g, C).max(axis=1)
    psum = packed[:, :, 1, :].reshape(B, n_split * g, C).sum(axis=1)
    if rem > 0:
        tail = x[:, n_full * g:, :].astype(jnp.float32)   # [B, rem, C], tiny
        pmax = jnp.maximum(pmax, jnp.max(tail, axis=1))
        psum = psum + jnp.sum(tail, axis=1)
    return jnp.concatenate([pmax, psum * (1.0 / N)], axis=-1).astype(in_dtype)


if __name__ == "__main__":
    # GlobalMaxAvgPool has no learnable parameters (pure pooling module).
    key = jax.random.PRNGKey(0)
    ks = jax.random.split(key, 6)

    def reference(x):
        xf = x.astype(jnp.float32)
        return jnp.concatenate([jnp.max(xf, axis=1), jnp.mean(xf, axis=1)], axis=-1)

    # (1) clean case: C=16 packs exactly to 128 lanes, single full tile
    x1 = jax.random.normal(ks[0], (2, 64, 16), dtype=jnp.float32)
    o1 = jax.block_until_ready(global_max_avg_pool(x1))
    assert o1.shape == (2, 32), o1.shape
    assert jnp.allclose(o1, reference(x1), atol=1e-5, rtol=1e-5), "case 1 mismatch"

    # (2) ragged case: N=100, C=24 (g=16 does not divide N) -> <g tail folded in
    #     the epilogue; mostly-negative values so unmasked garbage would corrupt max
    x2 = jax.random.normal(ks[1], (2, 100, 24), dtype=jnp.float32) - 1.0
    o2 = jax.block_until_ready(global_max_avg_pool(x2))
    assert o2.shape == (2, 48), o2.shape
    assert jnp.allclose(o2, reference(x2), atol=1e-5, rtol=1e-5), "case 2 mismatch"

    # (3) multi-tile sequential reduction: tiny block budget forces 8 grid steps
    x3 = jax.random.normal(ks[2], (2, 512, 16), dtype=jnp.float32)
    o3 = jax.block_until_ready(global_max_avg_pool(x3, block_bytes=4096))
    assert o3.shape == (2, 32), o3.shape
    assert jnp.allclose(o3, reference(x3), atol=1e-5, rtol=1e-5), "case 3 mismatch"

    # (4) B == 1 core-split path with a partial last tile (masked max AND sum)
    x4 = jax.random.normal(ks[3], (1, 304, 32), dtype=jnp.float32) - 1.0
    o4 = jax.block_until_ready(global_max_avg_pool(x4))
    assert o4.shape == (1, 64), o4.shape
    assert jnp.allclose(o4, reference(x4), atol=1e-5, rtol=1e-5), "case 4 mismatch"

    # (5) core split with a phantom tile (num_tiles does not divide evenly)
    x5 = jax.random.normal(ks[4], (1, 80, 32), dtype=jnp.float32) - 1.0
    o5 = jax.block_until_ready(global_max_avg_pool(x5, block_bytes=4096))
    assert o5.shape == (1, 64), o5.shape
    assert jnp.allclose(o5, reference(x5), atol=1e-5, rtol=1e-5), "case 5 mismatch"

    # (6) bf16 input: max accumulated natively in bf16, sum in f32
    x6 = jax.random.normal(ks[5], (2, 256, 16), dtype=jnp.bfloat16)
    o6 = jax.block_until_ready(global_max_avg_pool(x6))
    assert o6.shape == (2, 32) and o6.dtype == jnp.bfloat16, (o6.shape, o6.dtype)
    assert jnp.allclose(o6.astype(jnp.float32), reference(x6),
                        atol=1e-2, rtol=1e-2), "case 6 mismatch"

    print("KERNEL_OK")
</pallas_src>

<mosaic_0001>
module attributes {stable_mosaic.version = 11 : i64} {
  func.func @kernel(%arg0: i32, %arg1: i32, %arg2: i32, %arg3: memref<1x8x128xf32, #tpu.memory_space<vmem>>, %arg4: memref<1x1x2x128xf32, #tpu.memory_space<vmem>>, %arg5: memref<1x128xf32, #tpu.memory_space<vmem>>, %arg6: memref<1x128xf32, #tpu.memory_space<vmem>>) attributes {dimension_semantics = [#tpu.dimension_semantics<parallel>, #tpu.dimension_semantics<parallel>, #tpu.dimension_semantics<arbitrary>], iteration_bounds = array<i64: 2, 1, 1>, scalar_prefetch = 0 : i64, scratch_operands = 2 : i64, tpu.core_type = #tpu.core_type<tc>, window_params = [{transform_indices = @transform_0, window_bounds = array<i64: 1, 8, 128>}, {transform_indices = @transform_1, window_bounds = array<i64: 1, 1, 2, 128>}]} {
    %c0_i32 = arith.constant 0 : i32
    %0 = arith.cmpi eq, %arg2, %c0_i32 : i32
    %1 = arith.extui %0 : i1 to i32
    %c0_i32_0 = arith.constant 0 : i32
    %2 = arith.cmpi ne, %1, %c0_i32_0 : i32
    scf.if %2 {
      %cst_14 = arith.constant 0xFF800000 : f32
      %18 = vector.broadcast %cst_14 : f32 to vector<1x128xf32>
      %c0_15 = arith.constant 0 : index
      %c0_16 = arith.constant 0 : index
      %19 = vector.load %arg5[%c0_15, %c0_16] : memref<1x128xf32, #tpu.memory_space<vmem>>, vector<1x128xf32>
      tpu.vector_store %arg5[%c0_15, %c0_16], %18 {strides = array<i32>} : memref<1x128xf32, #tpu.memory_space<vmem>>, vector<1x128xf32>,
      %cst_17 = arith.constant 0.000000e+00 : f32
      %20 = vector.broadcast %cst_17 : f32 to vector<1x128xf32>
      %c0_18 = arith.constant 0 : index
      %c0_19 = arith.constant 0 : index
      %21 = vector.load %arg6[%c0_18, %c0_19] : memref<1x128xf32, #tpu.memory_space<vmem>>, vector<1x128xf32>
      tpu.vector_store %arg6[%c0_18, %c0_19], %20 {strides = array<i32>} : memref<1x128xf32, #tpu.memory_space<vmem>>, vector<1x128xf32>,
    } else {
    }
    %c0 = arith.constant 0 : index
    %c0_1 = arith.constant 0 : index
    %c0_2 = arith.constant 0 : index
    %3 = vector.load %arg3[%c0, %c0_1, %c0_2] : memref<1x8x128xf32, #tpu.memory_space<vmem>>, vector<1x8x128xf32>
    %4 = vector.shape_cast %3 : vector<1x8x128xf32> to vector<8x128xf32>
    %c0_3 = arith.constant 0 : index
    %c0_4 = arith.constant 0 : index
    %5 = vector.load %arg5[%c0_3, %c0_4] : memref<1x128xf32, #tpu.memory_space<vmem>>, vector<1x128xf32>
    %cst = arith.constant dense<0xFF800000> : vector<128xf32>
    %6 = vector.multi_reduction <maximumf>, %4, %cst [0] : vector<8x128xf32> to vector<128xf32>
    %7 = vector.shape_cast %6 : vector<128xf32> to vector<1x128xf32>
    %8 = arith.maximumf %5, %7 : vector<1x128xf32>
    %c0_5 = arith.constant 0 : index
    %c0_6 = arith.constant 0 : index
    %9 = vector.load %arg5[%c0_5, %c0_6] : memref<1x128xf32, #tpu.memory_space<vmem>>, vector<1x128xf32>
    tpu.vector_store %arg5[%c0_5, %c0_6], %8 {strides = array<i32>} : memref<1x128xf32, #tpu.memory_space<vmem>>, vector<1x128xf32>,
    %c0_7 = arith.constant 0 : index
    %c0_8 = arith.constant 0 : index
    %10 = vector.load %arg6[%c0_7, %c0_8] : memref<1x128xf32, #tpu.memory_space<vmem>>, vector<1x128xf32>
    %cst_9 = arith.constant dense<0.000000e+00> : vector<128xf32>
    %11 = vector.multi_reduction <add>, %4, %cst_9 [0] : vector<8x128xf32> to vector<128xf32>
    %12 = vector.shape_cast %11 : vector<128xf32> to vector<1x128xf32>
    %13 = arith.addf %10, %12 : vector<1x128xf32>
    %c0_10 = arith.constant 0 : index
    %c0_11 = arith.constant 0 : index
    %14 = vector.load %arg6[%c0_10, %c0_11] : memref<1x128xf32, #tpu.memory_space<vmem>>, vector<1x128xf32>
    tpu.vector_store %arg6[%c0_10, %c0_11], %13 {strides = array<i32>} : memref<1x128xf32, #tpu.memory_space<vmem>>, vector<1x128xf32>,
    %c0_i32_12 = arith.constant 0 : i32
    %15 = arith.cmpi eq, %arg2, %c0_i32_12 : i32
    %16 = arith.extui %15 : i1 to i32
    %c0_i32_13 = arith.constant 0 : i32
    %17 = arith.cmpi ne, %16, %c0_i32_13 : i32
    scf.if %17 {
      %c0_14 = arith.constant 0 : index
      %c0_15 = arith.constant 0 : index
      %18 = vector.load %arg5[%c0_14, %c0_15] : memref<1x128xf32, #tpu.memory_space<vmem>>, vector<1x128xf32>
      %c0_16 = arith.constant 0 : index
      %c0_17 = arith.constant 0 : index
      %c0_18 = arith.constant 0 : index
      %c0_19 = arith.constant 0 : index
      %19 = vector.load %arg4[%c0_16, %c0_17, %c0_18, %c0_19] : memref<1x1x2x128xf32, #tpu.memory_space<vmem>>, vector<1x1x1x128xf32>
      %20 = vector.shape_cast %19 : vector<1x1x1x128xf32> to vector<1x128xf32>
      %21 = vector.shape_cast %18 : vector<1x128xf32> to vector<1x1x1x128xf32>
      tpu.vector_store %arg4[%c0_16, %c0_17, %c0_18, %c0_19], %21 {strides = array<i32>} : memref<1x1x2x128xf32, #tpu.memory_space<vmem>>, vector<1x1x1x128xf32>,
      %c0_20 = arith.constant 0 : index
      %c0_21 = arith.constant 0 : index
      %22 = vector.load %arg6[%c0_20, %c0_21] : memref<1x128xf32, #tpu.memory_space<vmem>>, vector<1x128xf32>
      %c0_22 = arith.constant 0 : index
      %c0_23 = arith.constant 0 : index
      %c1 = arith.constant 1 : index
      %c0_24 = arith.constant 0 : index
      %23 = vector.load %arg4[%c0_22, %c0_23, %c1, %c0_24] : memref<1x1x2x128xf32, #tpu.memory_space<vmem>>, vector<1x1x1x128xf32>
      %24 = vector.shape_cast %23 : vector<1x1x1x128xf32> to vector<1x128xf32>
      %25 = vector.shape_cast %22 : vector<1x128xf32> to vector<1x1x1x128xf32>
      tpu.vector_store %arg4[%c0_22, %c0_23, %c1, %c0_24], %25 {strides = array<i32>} : memref<1x1x2x128xf32, #tpu.memory_space<vmem>>, vector<1x1x1x128xf32>,
    } else {
    }
    return
  }
  func.func @transform_0(%arg0: i32, %arg1: i32, %arg2: i32) -> (i32, i32, i32) {
    %c1_i32 = arith.constant 1 : i32
    %0 = arith.muli %arg1, %c1_i32 : i32
    %1 = arith.addi %0, %arg2 : i32
    %c0_i32 = arith.constant 0 : i32
    %c0_i32_0 = arith.constant 0 : i32
    return %arg0, %1, %c0_i32 : i32, i32, i32
  }
  func.func @transform_1(%arg0: i32, %arg1: i32, %arg2: i32) -> (i32, i32, i32, i32) {
    %c0_i32 = arith.constant 0 : i32
    %c0_i32_0 = arith.constant 0 : i32
    %c0_i32_1 = arith.constant 0 : i32
    return %arg0, %arg1, %c0_i32, %c0_i32_0 : i32, i32, i32, i32
  }
}

</mosaic_0001>

<llo_original>
// kernel: tpu_custom_call.1
$region0: #{tpu_custom_call.1}
  #allocation0 [shape = 'u32[]', space=smem, size = 0x4, offset = 0x4, fixed_abs, tag = 'smem constant byte address 0x4 - core index']
  #allocation1 [shape = 'u32[144,128]{1,0:T(1,128)}', space=vmem, size = 0x12000, scoped, tag = 'internal scratch']
  #allocation2 [shape = 'f32[1,128]{1,0:T(1,128)}', space=vmem, size = 0x200, scoped, tag = 'scratch operand']
  #allocation3 [shape = 'f32[1,128]{1,0:T(1,128)}', space=vmem, size = 0x200, scoped, tag = 'scratch operand']
  %s0 = inlined_call_operand.hbm [shape: f32[2,8,128], index: 0, kind: input, shape index: {}]
  %s1 = inlined_call_operand.hbm [shape: f32[2,1,2,128], index: 1, kind: output, shape index: {}]
  %s2 = sld [smem:[#allocation0]]
  $region49: #{tpu_custom_call.1} parent=0
    _
  %s4 = ssub.s32 1, %s2
  %s5 = scalar_select 0, %s4, %s2
  $region1: #{tpu_custom_call.1} parent=0
    #allocation4 [shape = 'u8[8192]{0}', space=vmem, size = 0x2000, scoped, tag = 'input window, operand 0']
    #allocation5 [shape = 's32[2]{0}', space=sflag, size = 0x8, scoped, tag = 'scoped memory for tpu_custom_call.1']
    #allocation6 [shape = 's32[2]{0}', space=sflag, size = 0x8, scoped, tag = 'scoped memory for tpu_custom_call.1']
    #allocation7 [shape = 'u8[2048]{0}', space=vmem, size = 0x800, scoped, tag = 'output window, operand 0']
    %6 = vsyncpa [#allocation5], 0
    %s7 = scalar_lea.sflag [#allocation5], 1
    %8 = vsyncpa %s7, 0
    %9 = vsyncpa [#allocation6], 0
    %s10 = scalar_lea.sflag [#allocation6], 1
    %11 = vsyncpa %s10, 0
    loop: start=0, step=1, limit=4
    $region2: #{tpu_custom_call.1} parent=1 // loop_pre_header
      _
    $region3: #{tpu_custom_call.1} parent=1 // loop_header
      %s13 = sphi 0, %s17
      %p14 = scmp.ge.s32.totalorder %s13, 4
      %s20 = sphi 0, %s39
      %s21 = sphi 0, %s35
      %s22 = sphi 0, %s31
      %s23 = sphi 0, %s20
      %s24 = sphi 0, %s21
      %s25 = sphi 0, %s22
      %s26 = sphi 0, %s23
      %s27 = sphi 0, %s24
      %s28 = sphi 0, %s25
      %s46 = sphi 0, %s48
      %s49 = sphi 0, %s46
      %s50 = sphi 0, %s49
      %s66 = sphi 0, %s50
      %s74 = sphi 0, %s76
      %s77 = sphi 0, %s74
      %s78 = sphi 0, %s77
      %s94 = sphi 0, %s78
    $region4: #{tpu_custom_call.1} parent=1 // loop_header_branch
      %16 = sbr.rel (%p14) target = $region8
    $region5: #{tpu_custom_call.1} parent=1 // loop_body
      %s18 = ssub.s32 %s13, 1
      %s19 = ssub.s32 %s13, 2
      %s29 = sadd.s32 1, %s22
      %p30 = scmp.ge.s32.totalorder %s29, 1
      %s31 = scalar_select %p30, 0, %s29
      %s32 = sadd.s32 1, %s21
      %s33 = scalar_select %p30, %s32, %s21
      %p34 = scmp.ge.s32.totalorder %s33, 1
      %s35 = scalar_select %p34, 0, %s33
      %s36 = sadd.s32 1, %s20
      %s37 = scalar_select %p34, %s36, %s20
      %p38 = scmp.ge.s32.totalorder %s37, 2
      %s39 = scalar_select %p38, 0, %s37
      %s40 = sadd.s32 %s21, %s22
      %s41 = sadd.s32 %s35, %s31
      %s42 = ssub.s32 %s20, %s39
      %s43 = ssub.s32 %s40, %s41
      %s44 = sor.u32 %s42, %s43
      %p45 = scmp.eq.s32.totalorder %s44, 0
      %s47 = sadd.s32 %s46, 1
      %s48 = scalar_select %p45, %s46, %s47
      %p51 = pneg %p45
      %p52 = scmp.eq.s32.totalorder %s13, 1
      %p53 = por %p51, %p52
      %p54 = scmp.ne.s32.totalorder %s46, %s49
      %p55 = scmp.eq.s32.totalorder %s13, 0
      %p56 = por %p54, %p55
      %p57 = scmp.ne.s32.totalorder %s46, %s49
      %p58 = scmp.eq.s32.totalorder %s18, 1
      %p59 = por %p57, %p58
      %p60 = scmp.ne.s32.totalorder %s49, %s50
      %p61 = scmp.eq.s32.totalorder %s18, 0
      %p62 = por %p60, %p61
      %p63 = scmp.ne.s32.totalorder %s49, %s50
      %p64 = scmp.eq.s32.totalorder %s19, 1
      %p65 = por %p63, %p64
      %p67 = scmp.ne.s32.totalorder %s50, %s66
      %p68 = scmp.eq.s32.totalorder %s19, 0
      %p69 = por %p67, %p68
      %s70 = ssub.s32 %s20, %s39
      %s71 = ssub.s32 %s21, %s35
      %s72 = sor.u32 %s70, %s71
      %p73 = scmp.eq.s32.totalorder %s72, 0
      %s75 = sadd.s32 %s74, 1
      %s76 = scalar_select %p73, %s74, %s75
      %p79 = pneg %p73
      %p80 = scmp.eq.s32.totalorder %s13, 1
      %p81 = por %p79, %p80
      %p82 = scmp.ne.s32.totalorder %s74, %s77
      %p83 = scmp.eq.s32.totalorder %s13, 0
      %p84 = por %p82, %p83
      %p85 = scmp.ne.s32.totalorder %s74, %s77
      %p86 = scmp.eq.s32.totalorder %s18, 1
      %p87 = por %p85, %p86
      %p88 = scmp.ne.s32.totalorder %s77, %s78
      %p89 = scmp.eq.s32.totalorder %s18, 0
      %p90 = por %p88, %p89
      %p91 = scmp.ne.s32.totalorder %s77, %s78
      %p92 = scmp.eq.s32.totalorder %s19, 1
      %p93 = por %p91, %p92
      %p95 = scmp.ne.s32.totalorder %s78, %s94
      %p96 = scmp.eq.s32.totalorder %s19, 0
      %p97 = por %p95, %p96
      %p98 = scmp.le.s32.totalorder 1, %s13
      %p99 = scmp.lt.s32.totalorder %s13, 3
      %p100 = pnand %p98, %p99
      %p101 = pneg %p100
      // Predicated region
      $region9: #{tpu_custom_call.1} parent=5 // pred_check
        _
      $region10: #{tpu_custom_call.1} parent=5 // pred_check_branch
        %103 = sbr.rel (%p100) target = $region12
      $region11: #{tpu_custom_call.1} parent=5 // pred_region
        %s104 = ssub.s32 %s13, 1
      $region12: #{tpu_custom_call.1} parent=5 // pred_fallthru
        _
      %p105 = scmp.lt.s32.totalorder %s13, 2
      // Predicated region
      $region13: #{tpu_custom_call.1} parent=5 // pred_check
        %p106 = pneg %p105
      $region14: #{tpu_custom_call.1} parent=5 // pred_check_branch
        %108 = sbr.rel (%p106) target = $region16
      $region15: #{tpu_custom_call.1} parent=5 // pred_region
        // Predicated region
        $region17: #{tpu_custom_call.1} parent=15 // pred_check
          %p109 = pneg %p56
        $region18: #{tpu_custom_call.1} parent=15 // pred_check_branch
          %111 = sbr.rel (%p109) target = $region20
        $region19: #{tpu_custom_call.1} parent=15 // pred_region
          %s112 = sand.u32 %s46, 1
          %s113 = scalar_lea.sflag [#allocation5], %s112
          %s114 = sand.u32 %s46, 1
          %s115 = smul.addr %s114, 8
          %s116 = scalar_lea.vmem [#allocation4], %s115
          %s117 = sadd.s32 %s21, %s22
          %s119 = ssub.s32 128, 128
          %120 = vsyncadd %s113, %s119
          %s121 = sadd.s32 %s117, %s20
          %s122 = smul.addr %s121, 128
          %s123 = scalar_lea.hbm %s0, %s122
          %s125 = sshll.u32 %s116, 4
          %s126 = int_to_ptr.vmem [resolvable:$true] %s125
          %128 = dma.hbm_to_vmem [thread:$0]  %s123, 128, %s126, %s113
        $region20: #{tpu_custom_call.1} parent=15 // pred_fallthru
          _
      $region16: #{tpu_custom_call.1} parent=5 // pred_fallthru
        _
      %p129 = scmp.le.s32.totalorder 1, %s13
      %p130 = scmp.lt.s32.totalorder %s13, 3
      %p131 = pnand %p129, %p130
      %p132 = pneg %p131
      // Predicated region
      $region21: #{tpu_custom_call.1} parent=5 // pred_check
        _
      $region22: #{tpu_custom_call.1} parent=5 // pred_check_branch
        %134 = sbr.rel (%p131) target = $region24
      $region23: #{tpu_custom_call.1} parent=5 // pred_region
        %s135 = ssub.s32 %s13, 1
        %s136 = sand.u32 %s49, 1
        %s137 = scalar_lea.sflag [#allocation5], %s136
        %s138 = sand.u32 %s49, 1
        %s139 = smul.addr %s138, 8
        %s140 = scalar_lea.vmem [#allocation4], %s139
        // Predicated region
        $region25: #{tpu_custom_call.1} parent=23 // pred_check
          %p141 = pneg %p62
        $region26: #{tpu_custom_call.1} parent=23 // pred_check_branch
          %143 = sbr.rel (%p141) target = $region28
        $region27: #{tpu_custom_call.1} parent=23 // pred_region
          %144 = dma.done %s137, 128
        $region28: #{tpu_custom_call.1} parent=23 // pred_fallthru
          _
        %s145 = sand.u32 %s49, 1
        %s146 = scalar_lea.sflag [#allocation5], %s145
        %s147 = sand.u32 %s49, 1
        %s148 = smul.addr %s147, 8
        %s149 = scalar_lea.vmem [#allocation4], %s148
        %p150 = pneg %p62
        %p151 = pneg %p59
        %p152 = pneg %p90
        %p153 = pneg %p87
        %s154 = sand.u32 %s77, 1
        %s155 = scalar_lea.sflag [#allocation6], %s154
        %s156 = sand.u32 %s77, 1
        %s157 = smul.addr %s156, 2
        %s158 = scalar_lea.vmem [#allocation7], %s157
        %s159 = sadd.s32 %s24, %s25
        %p160 = scmp.eq.s32.totalorder %s25, 0
        // Predicated region
        $region29: #{tpu_custom_call.1} parent=23 // pred_check
          %p161 = pneg %p160
        $region30: #{tpu_custom_call.1} parent=23 // pred_check_branch
          %163 = sbr.rel (%p161) target = $region32
        $region31: #{tpu_custom_call.1} parent=23 // pred_region
          %164 = vst [vmem:[#allocation2] sm:$0x1] -inf
          %165 = vst [vmem:[#allocation3] sm:$0x1] 0.0
        $region32: #{tpu_custom_call.1} parent=23 // pred_fallthru
          _
        %v166 = vld [vmem:[%s140] sm:$0xff]
        %v167 = vld [vmem:[#allocation2] sm:$0x1]
        %v168 = vrot.slane %v166, 4
        %v169 = vmax.f32 %v166, %v168
        %v170 = vrot.slane %v169, 2
        %v171 = vmax.f32 %v169, %v170
        %v172 = vrot.slane %v171, 1
        %v173 = vmax.f32 %v171, %v172
        %v174 = vmax.f32 %v167, %v173
        %175 = vst [vmem:[#allocation2] sm:$0x1] %v174
        %v176 = vld [vmem:[#allocation3] sm:$0x1]
        %v177 = vrot.slane %v166, 4
        %v178 = vadd.f32 %v166, %v177
        %v179 = vrot.slane %v178, 2
        %v180 = vadd.f32 %v178, %v179
        %v181 = vrot.slane %v180, 1
        %v182 = vadd.f32 %v180, %v181
        %v183 = vadd.f32 %v176, %v182
        %184 = vst [vmem:[#allocation3] sm:$0x1] %v183
        // Predicated region
        $region33: #{tpu_custom_call.1} parent=23 // pred_check
          %p185 = pneg %p160
        $region34: #{tpu_custom_call.1} parent=23 // pred_check_branch
          %187 = sbr.rel (%p185) target = $region36
        $region35: #{tpu_custom_call.1} parent=23 // pred_region
          %v188 = vld [vmem:[#allocation2] sm:$0x1]
          %189 = vst [vmem:[%s158] sm:$0x1] %v188
          %v190 = vld [vmem:[#allocation3] sm:$0x1]
          %191 = vst [vmem:[%s158 + $0x1] sm:$0x1] %v190
        $region36: #{tpu_custom_call.1} parent=23 // pred_fallthru
          _
        %s192 = sand.u32 %s77, 1
        %s193 = scalar_lea.sflag [#allocation6], %s192
        %s194 = sand.u32 %s77, 1
        %s195 = smul.addr %s194, 2
        %s196 = scalar_lea.vmem [#allocation7], %s195
        // Predicated region
        $region37: #{tpu_custom_call.1} parent=23 // pred_check
          %p197 = pneg %p87
        $region38: #{tpu_custom_call.1} parent=23 // pred_check_branch
          %199 = sbr.rel (%p197) target = $region40
        $region39: #{tpu_custom_call.1} parent=23 // pred_region
          %s201 = ssub.s32 32, 32
          %202 = vsyncadd %s193, %s201
          %s203 = sadd.s32 %s24, %s23
          %s204 = smul.addr %s203, 32
          %s205 = scalar_lea.hbm %s1, %s204
          %s207 = sshll.u32 %s196, 4
          %s208 = int_to_ptr.vmem [resolvable:$true] %s207
          %210 = dma.vmem_to_hbm [thread:$0]  %s208, 32, %s205, %s193
        $region40: #{tpu_custom_call.1} parent=23 // pred_fallthru
          _
      $region24: #{tpu_custom_call.1} parent=5 // pred_fallthru
        _
      %p211 = scmp.le.s32.totalorder 2, %s13
      // Predicated region
      $region41: #{tpu_custom_call.1} parent=5 // pred_check
        %p212 = pneg %p211
      $region42: #{tpu_custom_call.1} parent=5 // pred_check_branch
        %214 = sbr.rel (%p212) target = $region44
      $region43: #{tpu_custom_call.1} parent=5 // pred_region
        %s215 = ssub.s32 %s13, 2
        // Predicated region
        $region45: #{tpu_custom_call.1} parent=43 // pred_check
          %p216 = pneg %p93
        $region46: #{tpu_custom_call.1} parent=43 // pred_check_branch
          %218 = sbr.rel (%p216) target = $region48
        $region47: #{tpu_custom_call.1} parent=43 // pred_region
          %s219 = sand.u32 %s78, 1
          %s220 = scalar_lea.sflag [#allocation6], %s219
          %s221 = sand.u32 %s78, 1
          %s222 = smul.addr %s221, 2
          %s223 = scalar_lea.vmem [#allocation7], %s222
          %224 = dma.done %s220, 32
        $region48: #{tpu_custom_call.1} parent=43 // pred_fallthru
          _
      $region44: #{tpu_custom_call.1} parent=5 // pred_fallthru
        _
    $region6: #{tpu_custom_call.1} parent=1 // loop_footer
      %s17 = sadd.s32 1, %s13
    $region7: #{tpu_custom_call.1} parent=1 // loop_footer_branch
      %12 = sbr.rel target = $region3
    $region8: #{tpu_custom_call.1} parent=1 // loop_exit
      _
    %225 = vsyncpa [#allocation5], 1
    %s226 = scalar_lea.sflag [#allocation5], 1
    %227 = vsyncpa %s226, 1
    %228 = vsyncpa [#allocation6], 1
    %s229 = scalar_lea.sflag [#allocation6], 1
    %230 = vsyncpa %s229, 1

</llo_original>
